<compile_context>
chip_gen: v6e
topology: v6e:2x2x1
jax: 0.10.0
libtpu: 0.0.40
codegen_flags: <defaults>
</compile_context>

<pallas_src>
import functools

import jax
import jax.numpy as jnp
from jax.experimental import pallas as pl
from jax.experimental.pallas import tpu as pltpu

BETA = 0.1  # rho(x) = x + 0.5*BETA*x^2


def _triggs_kernel(r_ref, j_ref, sr_ref, sj_ref):
    R = r_ref[...].astype(jnp.float32)            # (TN, D)
    J = j_ref[...].astype(jnp.float32)            # (TN, D, Pp)

    # c_i = ||R_i||^2  (reduction over residual dim)
    x = jnp.sum(R * R, axis=-1, keepdims=True)    # (TN, 1)

    # analytic kernel derivatives: g1 = rho'(x) = 1 + BETA*x, g2 = rho''(x) = BETA (const)
    g1 = 1.0 + BETA * x                           # (TN, 1)
    se = jnp.sqrt(g1)                             # (TN, 1)

    sJ = se[:, :, None] * J                       # (TN, D, Pp)

    # mask of items that get the Triggs correction (g2 = BETA > 0 always, so M = x > 0)
    M = x > 0.0                                   # (TN, 1)
    safe_x = jnp.where(M, x, 1.0)                 # avoid 0/0 on masked-off rows

    # alpha = 1 - sqrt(clamp(1 + 2*x*g2/g1, 0));  for BETA > 0 the argument is >= 1.
    alpha = 1.0 - jnp.sqrt(jnp.maximum(1.0 + 2.0 * BETA * x / g1, 0.0))   # (TN, 1)

    # Residual correction. pypose quirk: the scalar se/(1-alpha) REPLACES every residual
    # component of the masked rows (it does not scale se*R).  1-alpha >= 1 here, so safe.
    sR = jnp.where(M, se / (1.0 - alpha), se * R)                          # (TN, D)

    # Jacobian correction folded into an unconditional update:
    #   Q[n,d,p] = R[n,d] * t[n,p],  t[n,p] = sum_k R[n,k] * sJ[n,k,p]
    #   sJ <- sJ - where(M, alpha/x, 0)[n] * Q[n]
    scale = jnp.where(M, alpha / safe_x, 0.0)     # (TN, 1), 0 where no correction
    t = jnp.sum(R[:, :, None] * sJ, axis=1)       # (TN, Pp)  sublane reduce over D
    scaled_R = scale * R                          # (TN, D)
    sJ = sJ - scaled_R[:, :, None] * t[:, None, :]

    sr_ref[...] = sR.astype(sr_ref.dtype)
    sj_ref[...] = sJ.astype(sj_ref.dtype)


def _round_up(v, m):
    return ((v + m - 1) // m) * m


def triggs_forward(R, J, *, tile_n=None, vmem_limit_bytes=64 * 1024 * 1024):
    """R: (N, D) float32, J: (N, D, P) float32 -> (sR (N, D), sJ (N, D, P))."""
    N, D = R.shape
    P = J.shape[-1]

    # Lane-dense last dim: pad P to a multiple of 128 (zero columns stay zero through the
    # correction, so slicing the output back is exact).
    P_pad = _round_up(max(P, 1), 128)

    # Pick tile_n so one f32 J block is ~4 MiB (mem-bound kernel: big, lane-dense DMAs),
    # rounded to a multiple of 8 sublanes, capped by the (padded) batch.
    if tile_n is None:
        target_block_bytes = 4 * 1024 * 1024
        rows = max(8, target_block_bytes // (D * P_pad * 4))
        tile_n = _round_up(min(rows, max(N, 1)), 8)
    tile_n = _round_up(tile_n, 8)

    N_pad = _round_up(N, tile_n)

    Rp = R
    Jp = J
    if N_pad != N:
        Rp = jnp.pad(Rp, ((0, N_pad - N), (0, 0)))
        Jp = jnp.pad(Jp, ((0, N_pad - N), (0, 0), (0, 0)))
    if P_pad != P:
        Jp = jnp.pad(Jp, ((0, 0), (0, 0), (0, P_pad - P)))

    grid = (N_pad // tile_n,)
    sR, sJ = pl.pallas_call(
        _triggs_kernel,
        out_shape=(
            jax.ShapeDtypeStruct((N_pad, D), R.dtype),
            jax.ShapeDtypeStruct((N_pad, D, P_pad), J.dtype),
        ),
        grid=grid,
        in_specs=[
            pl.BlockSpec((tile_n, D), lambda i: (i, 0)),
            pl.BlockSpec((tile_n, D, P_pad), lambda i: (i, 0, 0)),
        ],
        out_specs=(
            pl.BlockSpec((tile_n, D), lambda i: (i, 0)),
            pl.BlockSpec((tile_n, D, P_pad), lambda i: (i, 0, 0)),
        ),
        compiler_params=pltpu.CompilerParams(
            dimension_semantics=("parallel",),
            vmem_limit_bytes=vmem_limit_bytes,
        ),
    )(Rp, Jp)

    # Slice away batch / lane padding.
    if N_pad != N:
        sR = sR[:N]
        sJ = sJ[:N]
    if P_pad != P:
        sJ = sJ[:, :, :P]
    return sR, sJ


def _triggs_reference(R, J):
    """Pure-JAX reference mirroring the PyTorch code (uses jax.grad for the kernel)."""
    rho = lambda x: x + 0.5 * BETA * x * x
    x = jnp.sum(R * R, axis=-1, keepdims=True)
    g1 = jax.vmap(jax.grad(rho))(x.reshape(-1)).reshape(x.shape)
    g2 = jax.vmap(jax.grad(jax.grad(rho)))(x.reshape(-1)).reshape(x.shape)
    se = jnp.sqrt(g1)
    sR = se * R
    sJ = se[:, :, None] * J
    M = jnp.logical_not(jnp.logical_or(x == 0.0, g2 <= 0.0))
    safe_x = jnp.where(M, x, 1.0)
    alpha = 1.0 - jnp.sqrt(jnp.maximum(1.0 + 2.0 * x * g2 / g1, 0.0))
    sR = jnp.where(M, jnp.broadcast_to(se / (1.0 - alpha), sR.shape), sR)
    Q = jnp.einsum('nd,nk,nkl->ndl', R, R, sJ)
    sJ = jnp.where(M[:, :, None], sJ - (alpha / safe_x)[:, :, None] * Q, sJ)
    return sR, sJ


if __name__ == "__main__":
    # small shapes: N residual items, residual dim D, parameter dim P
    N, D, P = 16, 8, 32
    key = jax.random.PRNGKey(0)
    kr, kj = jax.random.split(key)
    R = jax.random.normal(kr, (N, D), dtype=jnp.float32)
    J = jax.random.normal(kj, (N, D, P), dtype=jnp.float32)

    sR, sJ = jax.block_until_ready(triggs_forward(R, J))

    sR_ref, sJ_ref = _triggs_reference(R, J)
    assert sR.shape == sR_ref.shape and sJ.shape == sJ_ref.shape
    assert jnp.allclose(sR, sR_ref, rtol=1e-4, atol=1e-4)
    assert jnp.allclose(sJ, sJ_ref, rtol=1e-4, atol=1e-4)

    print("KERNEL_OK")
</pallas_src>

<mosaic_0001>
module attributes {stable_mosaic.version = 11 : i64} {
  func.func @_triggs_kernel(%arg0: i32, %arg1: memref<16x8xf32, #tpu.memory_space<vmem>>, %arg2: memref<16x8x128xf32, #tpu.memory_space<vmem>>, %arg3: memref<16x8xf32, #tpu.memory_space<vmem>>, %arg4: memref<16x8x128xf32, #tpu.memory_space<vmem>>) attributes {dimension_semantics = [#tpu.dimension_semantics<parallel>], iteration_bounds = array<i64: 1>, scalar_prefetch = 0 : i64, scratch_operands = 0 : i64, tpu.core_type = #tpu.core_type<tc>, window_params = [{transform_indices = @transform_0, window_bounds = array<i64: 16, 8>}, {transform_indices = @transform_1, window_bounds = array<i64: 16, 8, 128>}, {transform_indices = @transform_2, window_bounds = array<i64: 16, 8>}, {transform_indices = @transform_3, window_bounds = array<i64: 16, 8, 128>}]} {
    %c0 = arith.constant 0 : index
    %c0_0 = arith.constant 0 : index
    %0 = vector.load %arg1[%c0, %c0_0] : memref<16x8xf32, #tpu.memory_space<vmem>>, vector<16x8xf32>
    %c0_1 = arith.constant 0 : index
    %c0_2 = arith.constant 0 : index
    %c0_3 = arith.constant 0 : index
    %1 = vector.load %arg2[%c0_1, %c0_2, %c0_3] : memref<16x8x128xf32, #tpu.memory_space<vmem>>, vector<16x8x128xf32>
    %2 = arith.mulf %0, %0 : vector<16x8xf32>
    %cst = arith.constant dense<0.000000e+00> : vector<16xf32>
    %3 = vector.multi_reduction <add>, %2, %cst [1] : vector<16x8xf32> to vector<16xf32>
    %4 = vector.shape_cast %3 : vector<16xf32> to vector<16x1xf32>
    %cst_4 = arith.constant 1.000000e-01 : f32
    %5 = vector.broadcast %cst_4 : f32 to vector<16x1xf32>
    %6 = arith.mulf %5, %4 : vector<16x1xf32>
    %cst_5 = arith.constant 1.000000e+00 : f32
    %7 = vector.broadcast %cst_5 : f32 to vector<16x1xf32>
    %8 = arith.addf %7, %6 : vector<16x1xf32>
    %9 = math.sqrt %8 : vector<16x1xf32>
    %10 = vector.shape_cast %9 : vector<16x1xf32> to vector<16x1x1xf32>
    %11 = vector.broadcast %10 : vector<16x1x1xf32> to vector<16x8x128xf32>
    %12 = arith.mulf %11, %1 : vector<16x8x128xf32>
    %cst_6 = arith.constant 0.000000e+00 : f32
    %13 = vector.broadcast %cst_6 : f32 to vector<16x1xf32>
    %14 = arith.cmpf ogt, %4, %13 : vector<16x1xf32>
    %cst_7 = arith.constant 1.000000e+00 : f32
    %15 = vector.broadcast %cst_7 : f32 to vector<16x1xf32>
    %16 = arith.select %14, %4, %15 : vector<16x1xi1>, vector<16x1xf32>
    %cst_8 = arith.constant 2.000000e-01 : f32
    %17 = vector.broadcast %cst_8 : f32 to vector<16x1xf32>
    %18 = arith.mulf %17, %4 : vector<16x1xf32>
    %19 = arith.divf %18, %8 : vector<16x1xf32>
    %cst_9 = arith.constant 1.000000e+00 : f32
    %20 = vector.broadcast %cst_9 : f32 to vector<16x1xf32>
    %21 = arith.addf %20, %19 : vector<16x1xf32>
    %cst_10 = arith.constant 0.000000e+00 : f32
    %22 = vector.broadcast %cst_10 : f32 to vector<16x1xf32>
    %23 = arith.maximumf %21, %22 : vector<16x1xf32>
    %24 = math.sqrt %23 : vector<16x1xf32>
    %cst_11 = arith.constant 1.000000e+00 : f32
    %25 = vector.broadcast %cst_11 : f32 to vector<16x1xf32>
    %26 = arith.subf %25, %24 : vector<16x1xf32>
    %cst_12 = arith.constant 1.000000e+00 : f32
    %27 = vector.broadcast %cst_12 : f32 to vector<16x1xf32>
    %28 = arith.subf %27, %26 : vector<16x1xf32>
    %29 = arith.divf %9, %28 : vector<16x1xf32>
    %30 = vector.broadcast %9 : vector<16x1xf32> to vector<16x8xf32>
    %31 = arith.mulf %30, %0 : vector<16x8xf32>
    %32 = vector.shape_cast %14 : vector<16x1xi1> to vector<16x1xi1>
    %33 = vector.broadcast %32 : vector<16x1xi1> to vector<16x8xi1>
    %34 = vector.shape_cast %29 : vector<16x1xf32> to vector<16x1xf32>
    %35 = vector.broadcast %34 : vector<16x1xf32> to vector<16x8xf32>
    %36 = arith.select %33, %35, %31 : vector<16x8xi1>, vector<16x8xf32>
    %37 = arith.divf %26, %16 : vector<16x1xf32>
    %cst_13 = arith.constant 0.000000e+00 : f32
    %38 = vector.broadcast %cst_13 : f32 to vector<16x1xf32>
    %39 = arith.select %14, %37, %38 : vector<16x1xi1>, vector<16x1xf32>
    %40 = vector.shape_cast %0 : vector<16x8xf32> to vector<16x8x1xf32>
    %41 = vector.broadcast %40 : vector<16x8x1xf32> to vector<16x8x128xf32>
    %42 = arith.mulf %41, %12 : vector<16x8x128xf32>
    %cst_14 = arith.constant dense<0.000000e+00> : vector<16x128xf32>
    %43 = vector.multi_reduction <add>, %42, %cst_14 [1] : vector<16x8x128xf32> to vector<16x128xf32>
    %44 = vector.broadcast %39 : vector<16x1xf32> to vector<16x8xf32>
    %45 = arith.mulf %44, %0 : vector<16x8xf32>
    %46 = vector.shape_cast %45 : vector<16x8xf32> to vector<16x8x1xf32>
    %47 = vector.shape_cast %43 : vector<16x128xf32> to vector<16x1x128xf32>
    %48 = vector.broadcast %46 : vector<16x8x1xf32> to vector<16x8x128xf32>
    %49 = vector.broadcast %47 : vector<16x1x128xf32> to vector<16x8x128xf32>
    %50 = arith.mulf %48, %49 : vector<16x8x128xf32>
    %51 = arith.subf %12, %50 : vector<16x8x128xf32>
    %c0_15 = arith.constant 0 : index
    %c0_16 = arith.constant 0 : index
    %52 = vector.load %arg3[%c0_15, %c0_16] : memref<16x8xf32, #tpu.memory_space<vmem>>, vector<16x8xf32>
    tpu.vector_store %arg3[%c0_15, %c0_16], %36 {strides = array<i32>} : memref<16x8xf32, #tpu.memory_space<vmem>>, vector<16x8xf32>,
    %c0_17 = arith.constant 0 : index
    %c0_18 = arith.constant 0 : index
    %c0_19 = arith.constant 0 : index
    %53 = vector.load %arg4[%c0_17, %c0_18, %c0_19] : memref<16x8x128xf32, #tpu.memory_space<vmem>>, vector<16x8x128xf32>
    tpu.vector_store %arg4[%c0_17, %c0_18, %c0_19], %51 {strides = array<i32>} : memref<16x8x128xf32, #tpu.memory_space<vmem>>, vector<16x8x128xf32>,
    return
  }
  func.func @transform_0(%arg0: i32) -> (i32, i32) {
    %c0_i32 = arith.constant 0 : i32
    %c0_i32_0 = arith.constant 0 : i32
    return %arg0, %c0_i32 : i32, i32
  }
  func.func @transform_1(%arg0: i32) -> (i32, i32, i32) {
    %c0_i32 = arith.constant 0 : i32
    %c0_i32_0 = arith.constant 0 : i32
    %c0_i32_1 = arith.constant 0 : i32
    return %arg0, %c0_i32, %c0_i32_0 : i32, i32, i32
  }
  func.func @transform_2(%arg0: i32) -> (i32, i32) {
    %c0_i32 = arith.constant 0 : i32
    %c0_i32_0 = arith.constant 0 : i32
    return %arg0, %c0_i32 : i32, i32
  }
  func.func @transform_3(%arg0: i32) -> (i32, i32, i32) {
    %c0_i32 = arith.constant 0 : i32
    %c0_i32_0 = arith.constant 0 : i32
    %c0_i32_1 = arith.constant 0 : i32
    return %arg0, %c0_i32, %c0_i32_0 : i32, i32, i32
  }
}

</mosaic_0001>

<llo_original>
// kernel: tpu_custom_call.1
$region0: #{tpu_custom_call.1}
  #allocation0 [shape = 'u32[]', space=smem, size = 0x4, offset = 0x4, fixed_abs, tag = 'smem constant byte address 0x4 - core index']
  #allocation1 [shape = 'u32[144,128]{1,0:T(1,128)}', space=vmem, size = 0x12000, scoped, tag = 'internal scratch']
  %s0 = inlined_call_operand.vmem [shape: f32[16,8], index: 0, kind: input, shape index: {}]
  %s1 = inlined_call_operand.hbm [shape: f32[16,8,128], index: 1, kind: input, shape index: {}]
  %s2 = inlined_call_operand.vmem [shape: f32[16,8], index: 2, kind: output, shape index: {0}]
  %s3 = inlined_call_operand.hbm [shape: f32[16,8,128], index: 3, kind: output, shape index: {1}]
  %4 = xla_tuple %s2, %s3
  %s5 = sld [smem:[#allocation0]]
  $region30: #{tpu_custom_call.1} parent=0
    _
  %s7 = ssub.s32 1, %s5
  %s8 = scalar_select 0, %s7, %s5
  $region1: #{tpu_custom_call.1} parent=0
    #allocation2 [shape = 'u8[65536]{0}', space=vmem, size = 0x10000, scoped, tag = 'input window, operand 1, single buffered']
    #allocation3 [shape = 's32[1]{0}', space=sflag, size = 0x4, scoped, tag = 'scoped memory for tpu_custom_call.1']
    #allocation4 [shape = 's32[1]{0}', space=sflag, size = 0x4, scoped, tag = 'scoped memory for tpu_custom_call.1']
    #allocation5 [shape = 'u8[65536]{0}', space=vmem, size = 0x10000, scoped, tag = 'output window, operand 1, single buffered']
    %9 = vsyncpa [#allocation3], 0
    %10 = vsyncpa [#allocation4], 0
    // Predicated region
    $region2: #{tpu_custom_call.1} parent=1 // pred_check
      _
    $region3: #{tpu_custom_call.1} parent=1 // pred_check_branch
      %12 = sbr.rel (0) target = $region5
    $region4: #{tpu_custom_call.1} parent=1 // pred_region
      _
    $region5: #{tpu_custom_call.1} parent=1 // pred_fallthru
      _
    // Predicated region
    $region6: #{tpu_custom_call.1} parent=1 // pred_check
      _
    $region7: #{tpu_custom_call.1} parent=1 // pred_check_branch
      %14 = sbr.rel (0) target = $region9
    $region8: #{tpu_custom_call.1} parent=1 // pred_region
      %s16 = ssub.s32 2048, 2048
      %17 = vsyncadd [#allocation3], %s16
      %s18 = sshll.u32 [#allocation2], 4
      %s19 = int_to_ptr.vmem [resolvable:$true] %s18
      %24 = dma.hbm_to_vmem [thread:$0]  %s1, 2048, %s19, [#allocation3], 128, 128, 8
    $region9: #{tpu_custom_call.1} parent=1 // pred_fallthru
      _
    // Predicated region
    $region10: #{tpu_custom_call.1} parent=1 // pred_check
      _
    $region11: #{tpu_custom_call.1} parent=1 // pred_check_branch
      %26 = sbr.rel (0) target = $region13
    $region12: #{tpu_custom_call.1} parent=1 // pred_region
      %27 = dma.done [#allocation3], 2048
    $region13: #{tpu_custom_call.1} parent=1 // pred_fallthru
      _
    %v28 = vld [vmem:[%s0] sm:$0xff]
    %v29 = vld [vmem:[%s0 + $0x8] sm:$0xff]
    %v30 = vld [vmem:[#allocation2] sm:$0xff]
    %v31 = vld [vmem:[#allocation2 + $0x8] sm:$0xff]
    %v32 = vld [vmem:[#allocation2 + $0x10] sm:$0xff]
    %v33 = vld [vmem:[#allocation2 + $0x18] sm:$0xff]
    %v34 = vld [vmem:[#allocation2 + $0x20] sm:$0xff]
    %v35 = vld [vmem:[#allocation2 + $0x28] sm:$0xff]
    %v36 = vld [vmem:[#allocation2 + $0x30] sm:$0xff]
    %v37 = vld [vmem:[#allocation2 + $0x38] sm:$0xff]
    %v38 = vld [vmem:[#allocation2 + $0x40] sm:$0xff]
    %v39 = vld [vmem:[#allocation2 + $0x48] sm:$0xff]
    %v40 = vld [vmem:[#allocation2 + $0x50] sm:$0xff]
    %v41 = vld [vmem:[#allocation2 + $0x58] sm:$0xff]
    %v42 = vld [vmem:[#allocation2 + $0x60] sm:$0xff]
    %v43 = vld [vmem:[#allocation2 + $0x68] sm:$0xff]
    %v44 = vld [vmem:[#allocation2 + $0x70] sm:$0xff]
    %v45 = vld [vmem:[#allocation2 + $0x78] sm:$0xff]
    %v46 = vmul.f32 %v28, %v28
    %v47 = vmul.f32 %v29, %v29
    %vm48 = vcmask 64512
    %v49 = vsel %vm48, %v46, 0.0
    %50 = vadd.xlane.f32.xlu0 %v49
    %v51 = vpop.xlane.xlu0 %50
    %v52 = vsel %vm48, %v47, 0.0
    %53 = vadd.xlane.f32.xlu0 %v52
    %v54 = vpop.xlane.xlu0 %53
    %v55 = vmul.f32 %v51, 0.1
    %v56 = vmul.f32 %v54, 0.1
    %v57 = vadd.f32 %v55, 1.0
    %v58 = vadd.f32 %v56, 1.0
    %v59 = vrsqrt.pop %v57
    %v60 = vmul.f32 %v57, %v59
    %vm61 = vcmp.eq.f32.partialorder %v57, inf
    %v62 = vsel %vm61, %v57, %v60
    %vm63 = vcmp.eq.f32.partialorder %v57, 0.0
    %v64 = vand.u32 %v57, 2147483648
    %v65 = vsel %vm63, %v64, %v62
    %v66 = vrsqrt.pop %v58
    %v67 = vmul.f32 %v58, %v66
    %vm68 = vcmp.eq.f32.partialorder %v58, inf
    %v69 = vsel %vm68, %v58, %v67
    %vm70 = vcmp.eq.f32.partialorder %v58, 0.0
    %v71 = vand.u32 %v58, 2147483648
    %v72 = vsel %vm70, %v71, %v69
    %v75 = vlaneseq
    %v76 = vshrl.u32 %v75, 7
    %v77 = vsub.s32 0, %v76
    %v78 = vrot.slane %v65, %v77
    %v79 = vlaneseq
    %v80 = vshrl.u32 %v79, 7
    %v81 = vsub.s32 1, %v80
    %v82 = vrot.slane %v65, %v81
    %v83 = vlaneseq
    %v84 = vshrl.u32 %v83, 7
    %v85 = vsub.s32 2, %v84
    %v86 = vrot.slane %v65, %v85
    %v87 = vlaneseq
    %v88 = vshrl.u32 %v87, 7
    %v89 = vsub.s32 3, %v88
    %v90 = vrot.slane %v65, %v89
    %v91 = vlaneseq
    %v92 = vshrl.u32 %v91, 7
    %v93 = vsub.s32 4, %v92
    %v94 = vrot.slane %v65, %v93
    %v95 = vlaneseq
    %v96 = vshrl.u32 %v95, 7
    %v97 = vsub.s32 5, %v96
    %v98 = vrot.slane %v65, %v97
    %v99 = vlaneseq
    %v100 = vshrl.u32 %v99, 7
    %v101 = vsub.s32 6, %v100
    %v102 = vrot.slane %v65, %v101
    %v103 = vlaneseq
    %v104 = vshrl.u32 %v103, 7
    %v105 = vsub.s32 7, %v104
    %v106 = vrot.slane %v65, %v105
    %v107 = vlaneseq
    %v108 = vshrl.u32 %v107, 7
    %v109 = vsub.s32 0, %v108
    %v110 = vrot.slane %v72, %v109
    %v111 = vlaneseq
    %v112 = vshrl.u32 %v111, 7
    %v113 = vsub.s32 1, %v112
    %v114 = vrot.slane %v72, %v113
    %v115 = vlaneseq
    %v116 = vshrl.u32 %v115, 7
    %v117 = vsub.s32 2, %v116
    %v118 = vrot.slane %v72, %v117
    %v119 = vlaneseq
    %v120 = vshrl.u32 %v119, 7
    %v121 = vsub.s32 3, %v120
    %v122 = vrot.slane %v72, %v121
    %v123 = vlaneseq
    %v124 = vshrl.u32 %v123, 7
    %v125 = vsub.s32 4, %v124
    %v126 = vrot.slane %v72, %v125
    %v127 = vlaneseq
    %v128 = vshrl.u32 %v127, 7
    %v129 = vsub.s32 5, %v128
    %v130 = vrot.slane %v72, %v129
    %v131 = vlaneseq
    %v132 = vshrl.u32 %v131, 7
    %v133 = vsub.s32 6, %v132
    %v134 = vrot.slane %v72, %v133
    %v135 = vlaneseq
    %v136 = vshrl.u32 %v135, 7
    %v137 = vsub.s32 7, %v136
    %v138 = vrot.slane %v72, %v137
    %v155 = vmul.f32 %v78, %v30
    %v156 = vmul.f32 %v82, %v31
    %v157 = vmul.f32 %v86, %v32
    %v158 = vmul.f32 %v90, %v33
    %v159 = vmul.f32 %v94, %v34
    %v160 = vmul.f32 %v98, %v35
    %v161 = vmul.f32 %v102, %v36
    %v162 = vmul.f32 %v106, %v37
    %v163 = vmul.f32 %v110, %v38
    %v164 = vmul.f32 %v114, %v39
    %v165 = vmul.f32 %v118, %v40
    %v166 = vmul.f32 %v122, %v41
    %v167 = vmul.f32 %v126, %v42
    %v168 = vmul.f32 %v130, %v43
    %v169 = vmul.f32 %v134, %v44
    %v170 = vmul.f32 %v138, %v45
    %vm171 = vcmp.gt.f32.partialorder %v51, 0.0
    %vm172 = vcmp.gt.f32.partialorder %v54, 0.0
    %v173 = vsel %vm171, %v51, 1.0
    %v174 = vsel %vm172, %v54, 1.0
    %v175 = vmul.f32 %v51, 0.2
    %v176 = vmul.f32 %v54, 0.2
    %v177 = vrcp.pop %v57
    %v178 = vmul.f32 %v175, %v177
    %v179 = vrcp.pop %v58
    %v180 = vmul.f32 %v176, %v179
    %v181 = vadd.f32 %v178, 1.0
    %v182 = vadd.f32 %v180, 1.0
    %v183 = vmax.f32 %v181, 0.0
    %v184 = vmax.f32 %v182, 0.0
    %v185 = vrsqrt.pop %v183
    %v186 = vmul.f32 %v183, %v185
    %vm187 = vcmp.eq.f32.partialorder %v183, inf
    %v188 = vsel %vm187, %v183, %v186
    %vm189 = vcmp.eq.f32.partialorder %v183, 0.0
    %v190 = vand.u32 %v183, 2147483648
    %v191 = vsel %vm189, %v190, %v188
    %v192 = vrsqrt.pop %v184
    %v193 = vmul.f32 %v184, %v192
    %vm194 = vcmp.eq.f32.partialorder %v184, inf
    %v195 = vsel %vm194, %v184, %v193
    %vm196 = vcmp.eq.f32.partialorder %v184, 0.0
    %v197 = vand.u32 %v184, 2147483648
    %v198 = vsel %vm196, %v197, %v195
    %v199 = vsub.f32 1.0, %v191
    %v200 = vsub.f32 1.0, %v198
    %v201 = vsub.f32 1.0, %v199
    %v202 = vsub.f32 1.0, %v200
    %v203 = vrcp.pop %v201
    %v204 = vmul.f32 %v65, %v203
    %v205 = vrcp.pop %v202
    %v206 = vmul.f32 %v72, %v205
    %v207 = vmul.f32 %v65, %v28
    %v208 = vmul.f32 %v72, %v29
    %v209 = vsel %vm171, 1, 0
    %v210 = vsel %vm172, 1, 0
    %vm211 = vcmp.eq.s32.totalorder %v209, 1
    %vm212 = vcmp.eq.s32.totalorder %v210, 1
    %v213 = vsel %vm211, %v204, %v207
    %v214 = vsel %vm212, %v206, %v208
    %v215 = vrcp.pop %v173
    %v216 = vmul.f32 %v199, %v215
    %v217 = vrcp.pop %v174
    %v218 = vmul.f32 %v200, %v217
    %v219 = vsel %vm171, %v216, 0.0
    %v220 = vsel %vm172, %v218, 0.0
    %v221 = vlaneseq
    %v222 = vshrl.u32 %v221, 7
    %v223 = vsub.s32 0, %v222
    %v224 = vrot.slane %v28, %v223
    %226 = vbcast.lane.b32.xlu0 %v224, 256
    %v227 = vpop.permute.xlu0 %226
    %v228 = vlaneseq
    %v229 = vshrl.u32 %v228, 7
    %v230 = vsub.s32 1, %v229
    %v231 = vrot.slane %v28, %v230
    %233 = vbcast.lane.b32.xlu0 %v231, 256
    %v234 = vpop.permute.xlu0 %233
    %v235 = vlaneseq
    %v236 = vshrl.u32 %v235, 7
    %v237 = vsub.s32 2, %v236
    %v238 = vrot.slane %v28, %v237
    %240 = vbcast.lane.b32.xlu0 %v238, 256
    %v241 = vpop.permute.xlu0 %240
    %v242 = vlaneseq
    %v243 = vshrl.u32 %v242, 7
    %v244 = vsub.s32 3, %v243
    %v245 = vrot.slane %v28, %v244
    %247 = vbcast.lane.b32.xlu0 %v245, 256
    %v248 = vpop.permute.xlu0 %247
    %v249 = vlaneseq
    %v250 = vshrl.u32 %v249, 7
    %v251 = vsub.s32 4, %v250
    %v252 = vrot.slane %v28, %v251
    %254 = vbcast.lane.b32.xlu0 %v252, 256
    %v255 = vpop.permute.xlu0 %254
    %v256 = vlaneseq
    %v257 = vshrl.u32 %v256, 7
    %v258 = vsub.s32 5, %v257
    %v259 = vrot.slane %v28, %v258
    %261 = vbcast.lane.b32.xlu0 %v259, 256
    %v262 = vpop.permute.xlu0 %261
    %v263 = vlaneseq
    %v264 = vshrl.u32 %v263, 7
    %v265 = vsub.s32 6, %v264
    %v266 = vrot.slane %v28, %v265
    %268 = vbcast.lane.b32.xlu0 %v266, 256
    %v269 = vpop.permute.xlu0 %268
    %v270 = vlaneseq
    %v271 = vshrl.u32 %v270, 7
    %v272 = vsub.s32 7, %v271
    %v273 = vrot.slane %v28, %v272
    %275 = vbcast.lane.b32.xlu0 %v273, 256
    %v276 = vpop.permute.xlu0 %275
    %v277 = vlaneseq
    %v278 = vshrl.u32 %v277, 7
    %v279 = vsub.s32 0, %v278
    %v280 = vrot.slane %v29, %v279
    %282 = vbcast.lane.b32.xlu0 %v280, 256
    %v283 = vpop.permute.xlu0 %282
    %v284 = vlaneseq
    %v285 = vshrl.u32 %v284, 7
    %v286 = vsub.s32 1, %v285
    %v287 = vrot.slane %v29, %v286
    %289 = vbcast.lane.b32.xlu0 %v287, 256
    %v290 = vpop.permute.xlu0 %289
    %v291 = vlaneseq
    %v292 = vshrl.u32 %v291, 7
    %v293 = vsub.s32 2, %v292
    %v294 = vrot.slane %v29, %v293
    %296 = vbcast.lane.b32.xlu0 %v294, 256
    %v297 = vpop.permute.xlu0 %296
    %v298 = vlaneseq
    %v299 = vshrl.u32 %v298, 7
    %v300 = vsub.s32 3, %v299
    %v301 = vrot.slane %v29, %v300
    %303 = vbcast.lane.b32.xlu0 %v301, 256
    %v304 = vpop.permute.xlu0 %303
    %v305 = vlaneseq
    %v306 = vshrl.u32 %v305, 7
    %v307 = vsub.s32 4, %v306
    %v308 = vrot.slane %v29, %v307
    %310 = vbcast.lane.b32.xlu0 %v308, 256
    %v311 = vpop.permute.xlu0 %310
    %v312 = vlaneseq
    %v313 = vshrl.u32 %v312, 7
    %v314 = vsub.s32 5, %v313
    %v315 = vrot.slane %v29, %v314
    %317 = vbcast.lane.b32.xlu0 %v315, 256
    %v318 = vpop.permute.xlu0 %317
    %v319 = vlaneseq
    %v320 = vshrl.u32 %v319, 7
    %v321 = vsub.s32 6, %v320
    %v322 = vrot.slane %v29, %v321
    %324 = vbcast.lane.b32.xlu0 %v322, 256
    %v325 = vpop.permute.xlu0 %324
    %v326 = vlaneseq
    %v327 = vshrl.u32 %v326, 7
    %v328 = vsub.s32 7, %v327
    %v329 = vrot.slane %v29, %v328
    %331 = vbcast.lane.b32.xlu0 %v329, 256
    %v332 = vpop.permute.xlu0 %331
    %v333 = vmul.f32 %v227, %v155
    %v334 = vmul.f32 %v234, %v156
    %v335 = vmul.f32 %v241, %v157
    %v336 = vmul.f32 %v248, %v158
    %v337 = vmul.f32 %v255, %v159
    %v338 = vmul.f32 %v262, %v160
    %v339 = vmul.f32 %v269, %v161
    %v340 = vmul.f32 %v276, %v162
    %v341 = vmul.f32 %v283, %v163
    %v342 = vmul.f32 %v290, %v164
    %v343 = vmul.f32 %v297, %v165
    %v344 = vmul.f32 %v304, %v166
    %v345 = vmul.f32 %v311, %v167
    %v346 = vmul.f32 %v318, %v168
    %v347 = vmul.f32 %v325, %v169
    %v348 = vmul.f32 %v332, %v170
    %v349 = vrot.slane %v333, 4
    %v350 = vadd.f32 %v333, %v349
    %v351 = vrot.slane %v350, 2
    %v352 = vadd.f32 %v350, %v351
    %v353 = vrot.slane %v352, 1
    %v354 = vadd.f32 %v352, %v353
    %v355 = vrot.slane %v334, 4
    %v356 = vadd.f32 %v334, %v355
    %v357 = vrot.slane %v356, 2
    %v358 = vadd.f32 %v356, %v357
    %v359 = vrot.slane %v358, 1
    %v360 = vadd.f32 %v358, %v359
    %v361 = vrot.slane %v335, 4
    %v362 = vadd.f32 %v335, %v361
    %v363 = vrot.slane %v362, 2
    %v364 = vadd.f32 %v362, %v363
    %v365 = vrot.slane %v364, 1
    %v366 = vadd.f32 %v364, %v365
    %v367 = vrot.slane %v336, 4
    %v368 = vadd.f32 %v336, %v367
    %v369 = vrot.slane %v368, 2
    %v370 = vadd.f32 %v368, %v369
    %v371 = vrot.slane %v370, 1
    %v372 = vadd.f32 %v370, %v371
    %v373 = vrot.slane %v337, 4
    %v374 = vadd.f32 %v337, %v373
    %v375 = vrot.slane %v374, 2
    %v376 = vadd.f32 %v374, %v375
    %v377 = vrot.slane %v376, 1
    %v378 = vadd.f32 %v376, %v377
    %v379 = vrot.slane %v338, 4
    %v380 = vadd.f32 %v338, %v379
    %v381 = vrot.slane %v380, 2
    %v382 = vadd.f32 %v380, %v381
    %v383 = vrot.slane %v382, 1
    %v384 = vadd.f32 %v382, %v383
    %v385 = vrot.slane %v339, 4
    %v386 = vadd.f32 %v339, %v385
    %v387 = vrot.slane %v386, 2
    %v388 = vadd.f32 %v386, %v387
    %v389 = vrot.slane %v388, 1
    %v390 = vadd.f32 %v388, %v389
    %v391 = vrot.slane %v340, 4
    %v392 = vadd.f32 %v340, %v391
    %v393 = vrot.slane %v392, 2
    %v394 = vadd.f32 %v392, %v393
    %v395 = vrot.slane %v394, 1
    %v396 = vadd.f32 %v394, %v395
    %v397 = vrot.slane %v341, 4
    %v398 = vadd.f32 %v341, %v397
    %v399 = vrot.slane %v398, 2
    %v400 = vadd.f32 %v398, %v399
    %v401 = vrot.slane %v400, 1
    %v402 = vadd.f32 %v400, %v401
    %v403 = vrot.slane %v342, 4
    %v404 = vadd.f32 %v342, %v403
    %v405 = vrot.slane %v404, 2
    %v406 = vadd.f32 %v404, %v405
    %v407 = vrot.slane %v406, 1
    %v408 = vadd.f32 %v406, %v407
    %v409 = vrot.slane %v343, 4
    %v410 = vadd.f32 %v343, %v409
    %v411 = vrot.slane %v410, 2
    %v412 = vadd.f32 %v410, %v411
    %v413 = vrot.slane %v412, 1
    %v414 = vadd.f32 %v412, %v413
    %v415 = vrot.slane %v344, 4
    %v416 = vadd.f32 %v344, %v415
    %v417 = vrot.slane %v416, 2
    %v418 = vadd.f32 %v416, %v417
    %v419 = vrot.slane %v418, 1
    %v420 = vadd.f32 %v418, %v419
    %v421 = vrot.slane %v345, 4
    %v422 = vadd.f32 %v345, %v421
    %v423 = vrot.slane %v422, 2
    %v424 = vadd.f32 %v422, %v423
    %v425 = vrot.slane %v424, 1
    %v426 = vadd.f32 %v424, %v425
    %v427 = vrot.slane %v346, 4
    %v428 = vadd.f32 %v346, %v427
    %v429 = vrot.slane %v428, 2
    %v430 = vadd.f32 %v428, %v429
    %v431 = vrot.slane %v430, 1
    %v432 = vadd.f32 %v430, %v431
    %v433 = vrot.slane %v347, 4
    %v434 = vadd.f32 %v347, %v433
    %v435 = vrot.slane %v434, 2
    %v436 = vadd.f32 %v434, %v435
    %v437 = vrot.slane %v436, 1
    %v438 = vadd.f32 %v436, %v437
    %v439 = vrot.slane %v348, 4
    %v440 = vadd.f32 %v348, %v439
    %v441 = vrot.slane %v440, 2
    %v442 = vadd.f32 %v440, %v441
    %v443 = vrot.slane %v442, 1
    %v444 = vadd.f32 %v442, %v443
    %v445 = vmul.f32 %v219, %v28
    %v446 = vmul.f32 %v220, %v29
    %v447 = vlaneseq
    %v448 = vshrl.u32 %v447, 7
    %v449 = vsub.s32 0, %v448
    %v450 = vrot.slane %v445, %v449
    %452 = vbcast.lane.b32.xlu0 %v450, 256
    %v453 = vpop.permute.xlu0 %452
    %v454 = vlaneseq
    %v455 = vshrl.u32 %v454, 7
    %v456 = vsub.s32 1, %v455
    %v457 = vrot.slane %v445, %v456
    %459 = vbcast.lane.b32.xlu0 %v457, 256
    %v460 = vpop.permute.xlu0 %459
    %v461 = vlaneseq
    %v462 = vshrl.u32 %v461, 7
    %v463 = vsub.s32 2, %v462
    %v464 = vrot.slane %v445, %v463
    %466 = vbcast.lane.b32.xlu0 %v464, 256
    %v467 = vpop.permute.xlu0 %466
    %v468 = vlaneseq
    %v469 = vshrl.u32 %v468, 7
    %v470 = vsub.s32 3, %v469
    %v471 = vrot.slane %v445, %v470
    %473 = vbcast.lane.b32.xlu0 %v471, 256
    %v474 = vpop.permute.xlu0 %473
    %v475 = vlaneseq
    %v476 = vshrl.u32 %v475, 7
    %v477 = vsub.s32 4, %v476
    %v478 = vrot.slane %v445, %v477
    %480 = vbcast.lane.b32.xlu0 %v478, 256
    %v481 = vpop.permute.xlu0 %480
    %v482 = vlaneseq
    %v483 = vshrl.u32 %v482, 7
    %v484 = vsub.s32 5, %v483
    %v485 = vrot.slane %v445, %v484
    %487 = vbcast.lane.b32.xlu0 %v485, 256
    %v488 = vpop.permute.xlu0 %487
    %v489 = vlaneseq
    %v490 = vshrl.u32 %v489, 7
    %v491 = vsub.s32 6, %v490
    %v492 = vrot.slane %v445, %v491
    %494 = vbcast.lane.b32.xlu0 %v492, 256
    %v495 = vpop.permute.xlu0 %494
    %v496 = vlaneseq
    %v497 = vshrl.u32 %v496, 7
    %v498 = vsub.s32 7, %v497
    %v499 = vrot.slane %v445, %v498
    %501 = vbcast.lane.b32.xlu0 %v499, 256
    %v502 = vpop.permute.xlu0 %501
    %v503 = vlaneseq
    %v504 = vshrl.u32 %v503, 7
    %v505 = vsub.s32 0, %v504
    %v506 = vrot.slane %v446, %v505
    %508 = vbcast.lane.b32.xlu0 %v506, 256
    %v509 = vpop.permute.xlu0 %508
    %v510 = vlaneseq
    %v511 = vshrl.u32 %v510, 7
    %v512 = vsub.s32 1, %v511
    %v513 = vrot.slane %v446, %v512
    %515 = vbcast.lane.b32.xlu0 %v513, 256
    %v516 = vpop.permute.xlu0 %515
    %v517 = vlaneseq
    %v518 = vshrl.u32 %v517, 7
    %v519 = vsub.s32 2, %v518
    %v520 = vrot.slane %v446, %v519
    %522 = vbcast.lane.b32.xlu0 %v520, 256
    %v523 = vpop.permute.xlu0 %522
    %v524 = vlaneseq
    %v525 = vshrl.u32 %v524, 7
    %v526 = vsub.s32 3, %v525
    %v527 = vrot.slane %v446, %v526
    %529 = vbcast.lane.b32.xlu0 %v527, 256
    %v530 = vpop.permute.xlu0 %529
    %v531 = vlaneseq
    %v532 = vshrl.u32 %v531, 7
    %v533 = vsub.s32 4, %v532
    %v534 = vrot.slane %v446, %v533
    %536 = vbcast.lane.b32.xlu0 %v534, 256
    %v537 = vpop.permute.xlu0 %536
    %v538 = vlaneseq
    %v539 = vshrl.u32 %v538, 7
    %v540 = vsub.s32 5, %v539
    %v541 = vrot.slane %v446, %v540
    %543 = vbcast.lane.b32.xlu0 %v541, 256
    %v544 = vpop.permute.xlu0 %543
    %v545 = vlaneseq
    %v546 = vshrl.u32 %v545, 7
    %v547 = vsub.s32 6, %v546
    %v548 = vrot.slane %v446, %v547
    %550 = vbcast.lane.b32.xlu0 %v548, 256
    %v551 = vpop.permute.xlu0 %550
    %v552 = vlaneseq
    %v553 = vshrl.u32 %v552, 7
    %v554 = vsub.s32 7, %v553
    %v555 = vrot.slane %v446, %v554
    %557 = vbcast.lane.b32.xlu0 %v555, 256
    %v558 = vpop.permute.xlu0 %557
    %v559 = vmul.f32 %v453, %v354
    %v560 = vmul.f32 %v460, %v360
    %v561 = vmul.f32 %v467, %v366
    %v562 = vmul.f32 %v474, %v372
    %v563 = vmul.f32 %v481, %v378
    %v564 = vmul.f32 %v488, %v384
    %v565 = vmul.f32 %v495, %v390
    %v566 = vmul.f32 %v502, %v396
    %v567 = vmul.f32 %v509, %v402
    %v568 = vmul.f32 %v516, %v408
    %v569 = vmul.f32 %v523, %v414
    %v570 = vmul.f32 %v530, %v420
    %v571 = vmul.f32 %v537, %v426
    %v572 = vmul.f32 %v544, %v432
    %v573 = vmul.f32 %v551, %v438
    %v574 = vmul.f32 %v558, %v444
    %v575 = vsub.f32 %v155, %v559
    %v576 = vsub.f32 %v156, %v560
    %v577 = vsub.f32 %v157, %v561
    %v578 = vsub.f32 %v158, %v562
    %v579 = vsub.f32 %v159, %v563
    %v580 = vsub.f32 %v160, %v564
    %v581 = vsub.f32 %v161, %v565
    %v582 = vsub.f32 %v162, %v566
    %v583 = vsub.f32 %v163, %v567
    %v584 = vsub.f32 %v164, %v568
    %v585 = vsub.f32 %v165, %v569
    %v586 = vsub.f32 %v166, %v570
    %v587 = vsub.f32 %v167, %v571
    %v588 = vsub.f32 %v168, %v572
    %v589 = vsub.f32 %v169, %v573
    %v590 = vsub.f32 %v170, %v574
    %591 = vst.msk [vmem:[%s2] sm:$0xff] %vm48, %v213
    %592 = vst.msk [vmem:[%s2 + $0x8] sm:$0xff] %vm48, %v214
    %593 = vst [vmem:[#allocation5] sm:$0xff] %v575
    %594 = vst [vmem:[#allocation5 + $0x8] sm:$0xff] %v576
    %595 = vst [vmem:[#allocation5 + $0x10] sm:$0xff] %v577
    %596 = vst [vmem:[#allocation5 + $0x18] sm:$0xff] %v578
    %597 = vst [vmem:[#allocation5 + $0x20] sm:$0xff] %v579
    %598 = vst [vmem:[#allocation5 + $0x28] sm:$0xff] %v580
    %599 = vst [vmem:[#allocation5 + $0x30] sm:$0xff] %v581
    %600 = vst [vmem:[#allocation5 + $0x38] sm:$0xff] %v582
    %601 = vst [vmem:[#allocation5 + $0x40] sm:$0xff] %v583
    %602 = vst [vmem:[#allocation5 + $0x48] sm:$0xff] %v584
    %603 = vst [vmem:[#allocation5 + $0x50] sm:$0xff] %v585
    %604 = vst [vmem:[#allocation5 + $0x58] sm:$0xff] %v586
    %605 = vst [vmem:[#allocation5 + $0x60] sm:$0xff] %v587
    %606 = vst [vmem:[#allocation5 + $0x68] sm:$0xff] %v588
    %607 = vst [vmem:[#allocation5 + $0x70] sm:$0xff] %v589
    %608 = vst [vmem:[#allocation5 + $0x78] sm:$0xff] %v590
    // Predicated region
    $region14: #{tpu_custom_call.1} parent=1 // pred_check
      _
    $region15: #{tpu_custom_call.1} parent=1 // pred_check_branch
      %610 = sbr.rel (0) target = $region17
    $region16: #{tpu_custom_call.1} parent=1 // pred_region
      _
    $region17: #{tpu_custom_call.1} parent=1 // pred_fallthru
      _
    // Predicated region
    $region18: #{tpu_custom_call.1} parent=1 // pred_check
      _
    $region19: #{tpu_custom_call.1} parent=1 // pred_check_branch
      %612 = sbr.rel (0) target = $region21
    $region20: #{tpu_custom_call.1} parent=1 // pred_region
      %s614 = ssub.s32 2048, 2048
      %615 = vsyncadd [#allocation4], %s614
      %s616 = sshll.u32 [#allocation5], 4
      %s617 = int_to_ptr.vmem [resolvable:$true] %s616
      %622 = dma.vmem_to_hbm [thread:$0]  %s617, 2048, %s3, [#allocation4], 128, 128, 8
    $region21: #{tpu_custom_call.1} parent=1 // pred_fallthru
      _
    // Predicated region
    $region22: #{tpu_custom_call.1} parent=1 // pred_check
      _
    $region23: #{tpu_custom_call.1} parent=1 // pred_check_branch
      %624 = sbr.rel (0) target = $region25
    $region24: #{tpu_custom_call.1} parent=1 // pred_region
      _
    $region25: #{tpu_custom_call.1} parent=1 // pred_fallthru
      _
    // Predicated region
    $region26: #{tpu_custom_call.1} parent=1 // pred_check
      _
    $region27: #{tpu_custom_call.1} parent=1 // pred_check_branch
      %626 = sbr.rel (0) target = $region29
    $region28: #{tpu_custom_call.1} parent=1 // pred_region
      %627 = dma.done [#allocation4], 2048
    $region29: #{tpu_custom_call.1} parent=1 // pred_fallthru
      _
    %628 = vsyncpa [#allocation3], 1
    %629 = vsyncpa [#allocation4], 1

</llo_original>
